<compile_context>
chip_gen: v7x
topology: tpu7x:2x2x1
jax: 0.10.0
libtpu: 0.0.40
codegen_flags: <defaults>
</compile_context>

<pallas_src>
import functools
import math

import jax
import jax.numpy as jnp
import numpy as np
from jax import lax
from jax.experimental import pallas as pl
from jax.experimental.pallas import tpu as pltpu


_SMALL_FALLBACK_BYTES = 128 * 1024        # below this, pallas_call fixed cost dominates
_TARGET_STEP_IN_BYTES = 4 * 1024 * 1024   # aim for >= 4 MiB of input per grid step


def _round_up(a, b):
    return (a + b - 1) // b * b


def _cdiv(a, b):
    return -(-a // b)


def _sublane_pack(itemsize):
    # sublane packing: 8 rows for 4-byte, 16 for 2-byte, 32 for 1-byte dtypes
    return max(8, 32 // max(itemsize, 1))


@functools.lru_cache(maxsize=1)
def _vmem_limit_bytes():
    """Generation-aware scoped-VMEM budget for this kernel."""
    try:
        cap = int(pltpu.get_tpu_info().vmem_capacity_bytes)
    except Exception:
        cap = 64 * 1024 * 1024  # conservative fallback (v7x physical per-TC)
    # Use at most half of physical VMEM: 64 MiB on v5e/v6e (128 MiB), 32 MiB on v7x.
    return min(cap // 2, 64 * 1024 * 1024)


def _acc_out_dtypes(dtype):
    """(accumulation dtype, output dtype) or (None, None) -> jnp fallback."""
    dtype = jnp.dtype(dtype)
    if jnp.issubdtype(dtype, jnp.floating):
        return jnp.float32, dtype
    if dtype == jnp.bool_:
        return None, None  # TODO(synk): bool sums fall back to jnp.sum (int promotion)
    if jnp.issubdtype(dtype, jnp.signedinteger):
        return (jnp.int32, jnp.int32) if dtype.itemsize < 4 else (dtype, dtype)
    if jnp.issubdtype(dtype, jnp.unsignedinteger):
        return (jnp.uint32, jnp.uint32) if dtype.itemsize < 4 else (dtype, dtype)
    return None, None  # complex etc.


# --------------------------------------------------------------------------- #
# Kernels
# --------------------------------------------------------------------------- #

def _sum_mid_kernel(x_ref, o_ref, *, acc_dtype):
    # x_ref: (T_B, R, T_L); o_ref: (T_B, 1, T_L)
    o_ref[...] = jnp.sum(x_ref[...].astype(acc_dtype), axis=1,
                         keepdims=True).astype(o_ref.dtype)


def _sum_mid_chunked_kernel(x_ref, o_ref, acc_ref, *, acc_dtype, r_total, t_r):
    # x_ref: (T_B, T_R, T_L); o_ref/acc_ref: (T_B, 1, T_L); grid axis 2 chunks R.
    k = pl.program_id(2)

    @pl.when(k == 0)
    def _():
        acc_ref[...] = jnp.zeros_like(acc_ref)

    x = x_ref[...].astype(acc_dtype)
    if r_total % t_r != 0:
        # Mask the garbage sublanes of the partial last R chunk.
        rows = lax.broadcasted_iota(jnp.int32, x.shape, 1)
        x = jnp.where(k * t_r + rows < r_total, x, jnp.zeros((), acc_dtype))
    acc_ref[...] += jnp.sum(x, axis=1, keepdims=True)

    @pl.when(k == pl.num_programs(2) - 1)
    def _():
        o_ref[...] = acc_ref[...].astype(o_ref.dtype)


def _sum_last_kernel(x_ref, o_ref, *, acc_dtype):
    # x_ref: (T_M, R) with R on lanes; o_ref: (T_M, 1). Cross-lane (XLU) reduce.
    o_ref[...] = jnp.sum(x_ref[...].astype(acc_dtype), axis=-1,
                         keepdims=True).astype(o_ref.dtype)


# --------------------------------------------------------------------------- #
# Block sizing
# --------------------------------------------------------------------------- #

def _choose_blocks_mid(B, R, L, in_isz, out_isz, usable, force_r_block=None):
    pack_in = _sublane_pack(in_isz)
    pack_out = _sublane_pack(out_isz)
    L128 = _round_up(L, 128)
    r_pad = _round_up(R, pack_in)

    # Double-buffered (input + output) bytes per lane column, full-R block.
    per_lane_full = 2 * (r_pad * in_isz + pack_out * out_isz)
    max_tl_full = (usable // per_lane_full) // 128 * 128

    chunk = max_tl_full < 128 or (force_r_block is not None and force_r_block < R)

    if not chunk:
        t_r = R
        t_l = max(128, min(L128, max_tl_full))
        in_per_b = r_pad * t_l * in_isz
        t_b_budget = max(1, usable // (per_lane_full * t_l))
        t_b_target = max(1, _cdiv(_TARGET_STEP_IN_BYTES, in_per_b))
        t_b = max(1, min(B, t_b_budget, t_b_target))
        r_blocks = 1
    else:
        t_l = min(L128, 1024)
        max_tr = 0
        while True:
            fixed = 2 * pack_out * t_l * out_isz + 8 * t_l * 4  # dbl-buf out + acc scratch
            max_tr = ((usable - fixed) // (2 * t_l * in_isz)) // pack_in * pack_in
            if max_tr >= pack_in or t_l <= 128:
                break
            t_l = max(128, t_l // 2)
        if max_tr < pack_in:
            return None
        if force_r_block is not None:
            t_r = _round_up(min(force_r_block, R), pack_in)
        else:
            t_r = r_pad
        t_r = min(t_r, max_tr, r_pad)
        t_b = 1
        r_blocks = _cdiv(R, t_r)

    # Keep >=2 steps along a "parallel" axis so both v7x TensorCores get work.
    if _cdiv(B, t_b) * _cdiv(L, t_l) < 2:
        if B >= 2 and t_b > 1:
            t_b = _cdiv(B, 2)
        elif L > 128 and t_l > 128:
            t_l = _round_up(_cdiv(L, 2), 128)

    return t_b, t_r, t_l, r_blocks


def _choose_blocks_last(M, R, in_isz, out_isz, usable):
    pack_in = _sublane_pack(in_isz)
    R128 = _round_up(R, 128)
    per_row = 2 * (R128 * in_isz + 128 * out_isz)  # dbl-buffered in+out per sublane row
    max_tm = (usable // per_row) // pack_in * pack_in
    if max_tm < pack_in:
        return None
    t_m = min(_round_up(M, pack_in), max_tm)
    if _cdiv(M, t_m) < 2 and M >= 2 * pack_in:
        t_m = _round_up(_cdiv(M, 2), pack_in)   # >=2 parallel steps for v7x
    return t_m


# --------------------------------------------------------------------------- #
# pallas_call wrappers
# --------------------------------------------------------------------------- #

def _pallas_sum_mid(x3, acc_dtype, out_dtype, force_r_block=None):
    """Sum over the middle axis of a (B, R, L) view. Returns (B, 1, L) or None."""
    B, R, L = x3.shape
    in_isz = jnp.dtype(x3.dtype).itemsize
    out_isz = jnp.dtype(out_dtype).itemsize
    limit = _vmem_limit_bytes()
    usable = int(limit * 0.85)

    blocks = _choose_blocks_mid(B, R, L, in_isz, out_isz, usable, force_r_block)
    if blocks is None:
        return None
    t_b, t_r, t_l, r_blocks = blocks

    out_shape = jax.ShapeDtypeStruct((B, 1, L), out_dtype)

    if r_blocks == 1 and t_r == R:
        kernel = functools.partial(_sum_mid_kernel, acc_dtype=acc_dtype)
        return pl.pallas_call(
            kernel,
            out_shape=out_shape,
            grid_spec=pltpu.PrefetchScalarGridSpec(
                num_scalar_prefetch=0,
                grid=(_cdiv(B, t_b), _cdiv(L, t_l)),
                in_specs=[pl.BlockSpec((t_b, R, t_l), lambda i, j: (i, 0, j))],
                out_specs=pl.BlockSpec((t_b, 1, t_l), lambda i, j: (i, 0, j)),
            ),
            compiler_params=pltpu.CompilerParams(
                dimension_semantics=("parallel", "parallel"),
                vmem_limit_bytes=limit),
        )(x3)

    kernel = functools.partial(_sum_mid_chunked_kernel, acc_dtype=acc_dtype,
                               r_total=R, t_r=t_r)
    return pl.pallas_call(
        kernel,
        out_shape=out_shape,
        grid_spec=pltpu.PrefetchScalarGridSpec(
            num_scalar_prefetch=0,
            grid=(_cdiv(B, t_b), _cdiv(L, t_l), r_blocks),
            in_specs=[pl.BlockSpec((t_b, t_r, t_l), lambda i, j, k: (i, k, j))],
            out_specs=pl.BlockSpec((t_b, 1, t_l), lambda i, j, k: (i, 0, j)),
            scratch_shapes=[pltpu.VMEM((t_b, 1, t_l), acc_dtype)],
        ),
        compiler_params=pltpu.CompilerParams(
            dimension_semantics=("parallel", "parallel", "arbitrary"),
            vmem_limit_bytes=limit),
    )(x3)


def _pallas_sum_last(x2, acc_dtype, out_dtype):
    """Sum over the last (lane) axis of a (M, R) view. Returns (M, 1) or None."""
    M, R = x2.shape
    in_isz = jnp.dtype(x2.dtype).itemsize
    out_isz = jnp.dtype(out_dtype).itemsize
    limit = _vmem_limit_bytes()
    usable = int(limit * 0.85)

    t_m = _choose_blocks_last(M, R, in_isz, out_isz, usable)
    if t_m is None:
        # TODO(synk): trailing-axis reductions too large for one VMEM lane block
        # fall back to jnp.sum instead of a lane-chunked kernel.
        return None

    kernel = functools.partial(_sum_last_kernel, acc_dtype=acc_dtype)
    return pl.pallas_call(
        kernel,
        out_shape=jax.ShapeDtypeStruct((M, 1), out_dtype),
        grid_spec=pltpu.PrefetchScalarGridSpec(
            num_scalar_prefetch=0,
            grid=(_cdiv(M, t_m),),
            in_specs=[pl.BlockSpec((t_m, R), lambda i: (i, 0))],
            out_specs=pl.BlockSpec((t_m, 1), lambda i: (i, 0)),
        ),
        compiler_params=pltpu.CompilerParams(
            dimension_semantics=("parallel",),
            vmem_limit_bytes=limit),
    )(x2)


# --------------------------------------------------------------------------- #
# Public API
# --------------------------------------------------------------------------- #

def pallas_sum(x, dim, keep_dim=False, *, force_pallas=False, max_r_block=None):
    """Sum `x` over `dim` (keepdim optional), matching torch.Tensor.sum(dim, keepdim)."""
    x = jnp.asarray(x)
    nd = x.ndim
    d = dim + nd if dim < 0 else dim

    acc_dtype, out_dtype = _acc_out_dtypes(x.dtype)
    total_bytes = x.size * jnp.dtype(x.dtype).itemsize

    use_pallas = (
        acc_dtype is not None
        and nd >= 2
        and all(s > 0 for s in x.shape)
        and (force_pallas or total_bytes >= _SMALL_FALLBACK_BYTES)
    )

    out = None
    if use_pallas:
        if d == nd - 1:
            # Lane-axis reduction: (lead..., R) -> (M, R), reduce along lanes.
            lead = x.shape[:-1]
            R = x.shape[-1]
            M = int(math.prod(lead))
            out2 = _pallas_sum_last(x.reshape(M, R), acc_dtype, out_dtype)
            if out2 is not None:
                out = out2.reshape(lead + (1,)) if keep_dim else out2.reshape(lead)
        else:
            # Middle-axis reduction: (lead..., R, trail...) -> (B, R, L).
            lead = x.shape[:d]
            R = x.shape[d]
            trail = x.shape[d + 1:]
            B = int(math.prod(lead)) if lead else 1
            L = int(math.prod(trail))
            out3 = _pallas_sum_mid(x.reshape(B, R, L), acc_dtype, out_dtype,
                                   force_r_block=max_r_block)
            if out3 is not None:
                new_shape = lead + ((1,) if keep_dim else ()) + trail
                out = out3.reshape(new_shape)

    if out is None:
        # Fallback: tiny tensors, 0/1-D inputs, bool/complex dtypes, or reductions
        # too large for a single VMEM lane block.
        out = jnp.sum(x, axis=d, keepdims=keep_dim)
    return out


class Sum:
    """Mirror of the PyTorch module: Sum(dim, keep_dim=False)."""

    def __init__(self, dim, keep_dim=False):
        self.dim = dim
        self.keep_dim = keep_dim

    def __call__(self, x):
        return pallas_sum(x, self.dim, self.keep_dim)


# --------------------------------------------------------------------------- #
# Tests
# --------------------------------------------------------------------------- #

if __name__ == "__main__":
    key = jax.random.PRNGKey(0)
    k1, k2, k3, k4 = jax.random.split(key, 4)

    # NCHW feature map matching the typical encoding.nn use of Sum(dim=1).
    x = jax.random.normal(k1, (2, 4, 16, 16), dtype=jnp.float32)

    # 1) Module path (auto heuristics; tiny tensor takes the jnp fallback).
    y = jax.block_until_ready(Sum(dim=1, keep_dim=False)(x))
    np.testing.assert_allclose(np.asarray(y), np.asarray(jnp.sum(x, axis=1)),
                               rtol=1e-5, atol=1e-5)

    # 2) Forced Pallas path, middle-dim reduction, keep_dim both ways.
    y2 = jax.block_until_ready(pallas_sum(x, 1, False, force_pallas=True))
    np.testing.assert_allclose(np.asarray(y2), np.asarray(jnp.sum(x, axis=1)),
                               rtol=1e-5, atol=1e-5)
    y2k = jax.block_until_ready(pallas_sum(x, 1, True, force_pallas=True))
    np.testing.assert_allclose(np.asarray(y2k),
                               np.asarray(jnp.sum(x, axis=1, keepdims=True)),
                               rtol=1e-5, atol=1e-5)

    # 3) Forced Pallas path, trailing-dim (lane) reduction — no wrapper transpose.
    y3 = jax.block_until_ready(pallas_sum(x, -1, False, force_pallas=True))
    np.testing.assert_allclose(np.asarray(y3), np.asarray(jnp.sum(x, axis=-1)),
                               rtol=1e-5, atol=1e-5)
    y3k = jax.block_until_ready(pallas_sum(x, -1, True, force_pallas=True))
    np.testing.assert_allclose(np.asarray(y3k),
                               np.asarray(jnp.sum(x, axis=-1, keepdims=True)),
                               rtol=1e-5, atol=1e-5)

    # 4) Partial lane and batch blocks (L and B not multiples of the tiles).
    xp = jax.random.normal(k2, (3, 4, 20, 20), dtype=jnp.float32)
    y4 = jax.block_until_ready(pallas_sum(xp, 1, False, force_pallas=True))
    np.testing.assert_allclose(np.asarray(y4), np.asarray(jnp.sum(xp, axis=1)),
                               rtol=1e-5, atol=1e-5)

    # 5) Chunked-R accumulator path (R not a multiple of the R tile -> masking).
    xr = jax.random.normal(k3, (2, 20, 8, 24), dtype=jnp.float32)
    y5 = jax.block_until_ready(
        pallas_sum(xr, 1, False, force_pallas=True, max_r_block=8))
    np.testing.assert_allclose(np.asarray(y5), np.asarray(jnp.sum(xr, axis=1)),
                               rtol=1e-5, atol=1e-5)

    # 6) Integer input, middle-dim reduction (int32 accumulation).
    xi = jax.random.randint(k4, (2, 6, 16, 16), -50, 50, dtype=jnp.int32)
    y6 = jax.block_until_ready(pallas_sum(xi, 2, False, force_pallas=True))
    np.testing.assert_array_equal(np.asarray(y6), np.asarray(jnp.sum(xi, axis=2)))

    print("KERNEL_OK")
</pallas_src>

<mosaic_0001>
module attributes {stable_mosaic.version = 11 : i64} {
  func.func @_sum_mid_kernel(%arg0: i32, %arg1: i32, %arg2: memref<1x4x256xf32, #tpu.memory_space<vmem>>, %arg3: memref<1x1x256xf32, #tpu.memory_space<vmem>>) attributes {dimension_semantics = [#tpu.dimension_semantics<parallel>, #tpu.dimension_semantics<parallel>], iteration_bounds = array<i64: 2, 1>, scalar_prefetch = 0 : i64, scratch_operands = 0 : i64, tpu.core_type = #tpu.core_type<tc>, window_params = [{transform_indices = @transform_0, window_bounds = array<i64: 1, 4, 256>}, {transform_indices = @transform_1, window_bounds = array<i64: 1, 1, 256>}]} {
    %c0 = arith.constant 0 : index
    %c0_0 = arith.constant 0 : index
    %c0_1 = arith.constant 0 : index
    %0 = vector.load %arg2[%c0, %c0_0, %c0_1] : memref<1x4x256xf32, #tpu.memory_space<vmem>>, vector<1x4x256xf32>
    %cst = arith.constant dense<0.000000e+00> : vector<1x256xf32>
    %1 = vector.multi_reduction <add>, %0, %cst [1] : vector<1x4x256xf32> to vector<1x256xf32>
    %2 = vector.shape_cast %1 : vector<1x256xf32> to vector<1x1x256xf32>
    %c0_2 = arith.constant 0 : index
    %c0_3 = arith.constant 0 : index
    %c0_4 = arith.constant 0 : index
    %3 = vector.load %arg3[%c0_2, %c0_3, %c0_4] : memref<1x1x256xf32, #tpu.memory_space<vmem>>, vector<1x1x256xf32>
    tpu.vector_store %arg3[%c0_2, %c0_3, %c0_4], %2 {strides = array<i32>} : memref<1x1x256xf32, #tpu.memory_space<vmem>>, vector<1x1x256xf32>,
    return
  }
  func.func @transform_0(%arg0: i32, %arg1: i32) -> (i32, i32, i32) {
    %c0_i32 = arith.constant 0 : i32
    %c0_i32_0 = arith.constant 0 : i32
    return %arg0, %c0_i32, %arg1 : i32, i32, i32
  }
  func.func @transform_1(%arg0: i32, %arg1: i32) -> (i32, i32, i32) {
    %c0_i32 = arith.constant 0 : i32
    %c0_i32_0 = arith.constant 0 : i32
    return %arg0, %c0_i32, %arg1 : i32, i32, i32
  }
}

</mosaic_0001>

<llo_original>
// kernel: tpu_custom_call.1
$region0: #{tpu_custom_call.1}
  #allocation0 [shape = 'u32[]', space=smem, size = 0x4, offset = 0x4, fixed_abs, tag = 'smem constant byte address 0x4 - core index']
  #allocation1 [shape = 'u32[144,128]{1,0:T(1,128)}', space=vmem, size = 0x12000, scoped, tag = 'internal scratch']
  %s0 = inlined_call_operand.hbm [shape: f32[2,4,256], index: 0, kind: input, shape index: {}]
  %s1 = inlined_call_operand.hbm [shape: f32[2,1,256], index: 1, kind: output, shape index: {}]
  %s2 = sld [smem:[#allocation0]]
  $region41: #{tpu_custom_call.1} parent=0
    _
  %s4 = ssub.s32 1, %s2
  %s5 = scalar_select 0, %s4, %s2
  $region1: #{tpu_custom_call.1} parent=0
    #allocation2 [shape = 'u8[8192]{0}', space=vmem, size = 0x2000, scoped, tag = 'input window, operand 0']
    #allocation3 [shape = 's32[2]{0}', space=sflag, size = 0x8, scoped, tag = 'scoped memory for tpu_custom_call.1']
    #allocation4 [shape = 's32[2]{0}', space=sflag, size = 0x8, scoped, tag = 'scoped memory for tpu_custom_call.1']
    #allocation5 [shape = 'u8[2048]{0}', space=vmem, size = 0x800, scoped, tag = 'output window, operand 0']
    %6 = vsyncpa [#allocation3], 0
    %s7 = scalar_lea.sflag [#allocation3], 1
    %8 = vsyncpa %s7, 0
    %9 = vsyncpa [#allocation4], 0
    %s10 = scalar_lea.sflag [#allocation4], 1
    %11 = vsyncpa %s10, 0
    loop: start=0, step=1, limit=4
    $region2: #{tpu_custom_call.1} parent=1 // loop_pre_header
      _
    $region3: #{tpu_custom_call.1} parent=1 // loop_header
      %s13 = sphi 0, %s17
      %p14 = scmp.ge.s32.totalorder %s13, 4
      %s20 = sphi 0, %s32
      %s21 = sphi 0, %s28
      %s22 = sphi 0, %s20
      %s23 = sphi 0, %s21
      %s24 = sphi 0, %s22
      %s25 = sphi 0, %s23
      %s37 = sphi 0, %s39
      %s40 = sphi 0, %s37
      %s41 = sphi 0, %s40
      %s57 = sphi 0, %s41
      %s65 = sphi 0, %s67
      %s68 = sphi 0, %s65
      %s69 = sphi 0, %s68
      %s85 = sphi 0, %s69
    $region4: #{tpu_custom_call.1} parent=1 // loop_header_branch
      %16 = sbr.rel (%p14) target = $region8
    $region5: #{tpu_custom_call.1} parent=1 // loop_body
      %s18 = ssub.s32 %s13, 1
      %s19 = ssub.s32 %s13, 2
      %s26 = sadd.s32 1, %s21
      %p27 = scmp.ge.s32.totalorder %s26, 1
      %s28 = scalar_select %p27, 0, %s26
      %s29 = sadd.s32 1, %s20
      %s30 = scalar_select %p27, %s29, %s20
      %p31 = scmp.ge.s32.totalorder %s30, 2
      %s32 = scalar_select %p31, 0, %s30
      %s33 = ssub.s32 %s20, %s32
      %s34 = ssub.s32 %s21, %s28
      %s35 = sor.u32 %s33, %s34
      %p36 = scmp.eq.s32.totalorder %s35, 0
      %s38 = sadd.s32 %s37, 1
      %s39 = scalar_select %p36, %s37, %s38
      %p42 = pneg %p36
      %p43 = scmp.eq.s32.totalorder %s13, 1
      %p44 = por %p42, %p43
      %p45 = scmp.ne.s32.totalorder %s37, %s40
      %p46 = scmp.eq.s32.totalorder %s13, 0
      %p47 = por %p45, %p46
      %p48 = scmp.ne.s32.totalorder %s37, %s40
      %p49 = scmp.eq.s32.totalorder %s18, 1
      %p50 = por %p48, %p49
      %p51 = scmp.ne.s32.totalorder %s40, %s41
      %p52 = scmp.eq.s32.totalorder %s18, 0
      %p53 = por %p51, %p52
      %p54 = scmp.ne.s32.totalorder %s40, %s41
      %p55 = scmp.eq.s32.totalorder %s19, 1
      %p56 = por %p54, %p55
      %p58 = scmp.ne.s32.totalorder %s41, %s57
      %p59 = scmp.eq.s32.totalorder %s19, 0
      %p60 = por %p58, %p59
      %s61 = ssub.s32 %s20, %s32
      %s62 = ssub.s32 %s21, %s28
      %s63 = sor.u32 %s61, %s62
      %p64 = scmp.eq.s32.totalorder %s63, 0
      %s66 = sadd.s32 %s65, 1
      %s67 = scalar_select %p64, %s65, %s66
      %p70 = pneg %p64
      %p71 = scmp.eq.s32.totalorder %s13, 1
      %p72 = por %p70, %p71
      %p73 = scmp.ne.s32.totalorder %s65, %s68
      %p74 = scmp.eq.s32.totalorder %s13, 0
      %p75 = por %p73, %p74
      %p76 = scmp.ne.s32.totalorder %s65, %s68
      %p77 = scmp.eq.s32.totalorder %s18, 1
      %p78 = por %p76, %p77
      %p79 = scmp.ne.s32.totalorder %s68, %s69
      %p80 = scmp.eq.s32.totalorder %s18, 0
      %p81 = por %p79, %p80
      %p82 = scmp.ne.s32.totalorder %s68, %s69
      %p83 = scmp.eq.s32.totalorder %s19, 1
      %p84 = por %p82, %p83
      %p86 = scmp.ne.s32.totalorder %s69, %s85
      %p87 = scmp.eq.s32.totalorder %s19, 0
      %p88 = por %p86, %p87
      %p89 = scmp.le.s32.totalorder 1, %s13
      %p90 = scmp.lt.s32.totalorder %s13, 3
      %p91 = pnand %p89, %p90
      %p92 = pneg %p91
      // Predicated region
      $region9: #{tpu_custom_call.1} parent=5 // pred_check
        _
      $region10: #{tpu_custom_call.1} parent=5 // pred_check_branch
        %94 = sbr.rel (%p91) target = $region12
      $region11: #{tpu_custom_call.1} parent=5 // pred_region
        %s95 = ssub.s32 %s13, 1
      $region12: #{tpu_custom_call.1} parent=5 // pred_fallthru
        _
      %p96 = scmp.lt.s32.totalorder %s13, 2
      // Predicated region
      $region13: #{tpu_custom_call.1} parent=5 // pred_check
        %p97 = pneg %p96
      $region14: #{tpu_custom_call.1} parent=5 // pred_check_branch
        %99 = sbr.rel (%p97) target = $region16
      $region15: #{tpu_custom_call.1} parent=5 // pred_region
        // Predicated region
        $region17: #{tpu_custom_call.1} parent=15 // pred_check
          %p100 = pneg %p47
        $region18: #{tpu_custom_call.1} parent=15 // pred_check_branch
          %102 = sbr.rel (%p100) target = $region20
        $region19: #{tpu_custom_call.1} parent=15 // pred_region
          %s103 = sand.u32 %s37, 1
          %s104 = scalar_lea.sflag [#allocation3], %s103
          %s105 = sand.u32 %s37, 1
          %s106 = smul.addr %s105, 8
          %s107 = scalar_lea.vmem [#allocation2], %s106
          %s108 = smul.u32 2, %s21
          %s110 = ssub.s32 128, 128
          %111 = vsyncadd %s104, %s110
          %s112 = smul.addr %s20, 2
          %s113 = sadd.s32 %s108, %s112
          %s114 = smul.addr %s113, 64
          %s115 = scalar_lea.hbm %s0, %s114
          %s117 = sshll.u32 %s107, 4
          %s118 = int_to_ptr.vmem [resolvable:$true] %s117
          %120 = dma.hbm_to_vmem [thread:$0]  %s115, 128, %s118, %s104
        $region20: #{tpu_custom_call.1} parent=15 // pred_fallthru
          _
      $region16: #{tpu_custom_call.1} parent=5 // pred_fallthru
        _
      %p121 = scmp.le.s32.totalorder 1, %s13
      %p122 = scmp.lt.s32.totalorder %s13, 3
      %p123 = pnand %p121, %p122
      %p124 = pneg %p123
      // Predicated region
      $region21: #{tpu_custom_call.1} parent=5 // pred_check
        _
      $region22: #{tpu_custom_call.1} parent=5 // pred_check_branch
        %126 = sbr.rel (%p123) target = $region24
      $region23: #{tpu_custom_call.1} parent=5 // pred_region
        %s127 = ssub.s32 %s13, 1
        %s128 = sand.u32 %s40, 1
        %s129 = scalar_lea.sflag [#allocation3], %s128
        %s130 = sand.u32 %s40, 1
        %s131 = smul.addr %s130, 8
        %s132 = scalar_lea.vmem [#allocation2], %s131
        // Predicated region
        $region25: #{tpu_custom_call.1} parent=23 // pred_check
          %p133 = pneg %p53
        $region26: #{tpu_custom_call.1} parent=23 // pred_check_branch
          %135 = sbr.rel (%p133) target = $region28
        $region27: #{tpu_custom_call.1} parent=23 // pred_region
          %136 = dma.done %s129, 128
        $region28: #{tpu_custom_call.1} parent=23 // pred_fallthru
          _
        %s137 = sand.u32 %s40, 1
        %s138 = scalar_lea.sflag [#allocation3], %s137
        %s139 = sand.u32 %s40, 1
        %s140 = smul.addr %s139, 8
        %s141 = scalar_lea.vmem [#allocation2], %s140
        %p142 = pneg %p53
        %p143 = pneg %p50
        %p144 = pneg %p81
        %p145 = pneg %p78
        %s146 = sand.u32 %s68, 1
        %s147 = scalar_lea.sflag [#allocation4], %s146
        %s148 = sand.u32 %s68, 1
        %s149 = smul.addr %s148, 2
        %s150 = scalar_lea.vmem [#allocation5], %s149
        %s151 = smul.u32 2, %s23
        %s152 = smul.u32 2, %s23
        %v153 = vld [vmem:[%s132] sm:$0xff]
        %v155 = vcombine.high %v153, %v153
        %vm157 = vcmask 1043456
        %v158 = vsel %vm157, %v153, 0.0
        %v159 = vrot.slane %v158, 4
        %v160 = vadd.f32 %v158, %v159
        %v161 = vrot.slane %v160, 2
        %v162 = vadd.f32 %v160, %v161
        %v163 = vrot.slane %v162, 1
        %v164 = vadd.f32 %v162, %v163
        %v165 = vsel %vm157, %v155, 0.0
        %v166 = vrot.slane %v165, 4
        %v167 = vadd.f32 %v165, %v166
        %v168 = vrot.slane %v167, 2
        %v169 = vadd.f32 %v167, %v168
        %v170 = vrot.slane %v169, 1
        %v171 = vadd.f32 %v169, %v170
        %v174 = vcombine.low %v164, %v171
        %v176 = vunpack.c.l.s4 1966171168
        %v177 = vunpack.c.0.s8 %v176
        %v178 = vlaneseq
        %v179 = vshrl.u32 %v178, 7
        %v180 = vsub.s32 %v177, %v179
        %v181 = vrot.slane %v174, %v180
        %v183 = vunpack.c.l.s4 1966171168
        %v184 = vunpack.c.0.s8 %v183
        %v185 = vlaneseq
        %v186 = vshrl.u32 %v185, 7
        %v187 = vsub.s32 %v184, %v186
        %v188 = vrot.slane %v181, %v187
        %v190 = vlaneseq
        %vm191 = vcmp.ge.s32.totalorder %v190, 0
        %vm192 = vcmp.lt.s32.totalorder %v190, 256
        %vm193 = vmand %vm191, %vm192
        %194 = vst.msk [vmem:[%s150] sm:$0x3] %vm193, %v188
        %s195 = sand.u32 %s68, 1
        %s196 = scalar_lea.sflag [#allocation4], %s195
        %s197 = sand.u32 %s68, 1
        %s198 = smul.addr %s197, 2
        %s199 = scalar_lea.vmem [#allocation5], %s198
        // Predicated region
        $region29: #{tpu_custom_call.1} parent=23 // pred_check
          %p200 = pneg %p78
        $region30: #{tpu_custom_call.1} parent=23 // pred_check_branch
          %202 = sbr.rel (%p200) target = $region32
        $region31: #{tpu_custom_call.1} parent=23 // pred_region
          %s203 = smul.u32 2, %s23
          %s205 = ssub.s32 32, 32
          %206 = vsyncadd %s196, %s205
          %s207 = smul.addr %s22, 2
          %s208 = sadd.s32 %s203, %s207
          %s209 = smul.addr %s208, 16
          %s210 = scalar_lea.hbm %s1, %s209
          %s212 = sshll.u32 %s199, 4
          %s213 = int_to_ptr.vmem [resolvable:$true] %s212
          %215 = dma.vmem_to_hbm [thread:$0]  %s213, 32, %s210, %s196
        $region32: #{tpu_custom_call.1} parent=23 // pred_fallthru
          _
      $region24: #{tpu_custom_call.1} parent=5 // pred_fallthru
        _
      %p216 = scmp.le.s32.totalorder 2, %s13
      // Predicated region
      $region33: #{tpu_custom_call.1} parent=5 // pred_check
        %p217 = pneg %p216
      $region34: #{tpu_custom_call.1} parent=5 // pred_check_branch
        %219 = sbr.rel (%p217) target = $region36
      $region35: #{tpu_custom_call.1} parent=5 // pred_region
        %s220 = ssub.s32 %s13, 2
        // Predicated region
        $region37: #{tpu_custom_call.1} parent=35 // pred_check
          %p221 = pneg %p84
        $region38: #{tpu_custom_call.1} parent=35 // pred_check_branch
          %223 = sbr.rel (%p221) target = $region40
        $region39: #{tpu_custom_call.1} parent=35 // pred_region
          %s224 = sand.u32 %s69, 1
          %s225 = scalar_lea.sflag [#allocation4], %s224
          %s226 = sand.u32 %s69, 1
          %s227 = smul.addr %s226, 2
          %s228 = scalar_lea.vmem [#allocation5], %s227
          %229 = dma.done %s225, 32
        $region40: #{tpu_custom_call.1} parent=35 // pred_fallthru
          _
      $region36: #{tpu_custom_call.1} parent=5 // pred_fallthru
        _
    $region6: #{tpu_custom_call.1} parent=1 // loop_footer
      %s17 = sadd.s32 1, %s13
    $region7: #{tpu_custom_call.1} parent=1 // loop_footer_branch
      %12 = sbr.rel target = $region3
    $region8: #{tpu_custom_call.1} parent=1 // loop_exit
      _
    %230 = vsyncpa [#allocation3], 1
    %s231 = scalar_lea.sflag [#allocation3], 1
    %232 = vsyncpa %s231, 1
    %233 = vsyncpa [#allocation4], 1
    %s234 = scalar_lea.sflag [#allocation4], 1
    %235 = vsyncpa %s234, 1

</llo_original>
